<compile_context>
chip_gen: v6e
topology: v6e:2x2x1
jax: 0.10.0
libtpu: 0.0.40
codegen_flags: <defaults>
</compile_context>

<pallas_src>
import functools

import jax
import jax.numpy as jnp
from jax.experimental import pallas as pl
from jax.experimental.pallas import tpu as pltpu

LEAKY_SLOPE = 0.01   # nn.LeakyReLU default
BN_EPS = 1e-5        # nn.BatchNorm1d default
LANE = 128
SUBLANE_BF16 = 16    # bf16 vreg is (16, 128)


def _round_up(x, m):
    return (x + m - 1) // m * m


def _fc_kernel(n_blocks, d_fc_p, n_tasks_p, h_ref, bias_ref, *refs):
    """Fused MLP head.

    Per block (previous block's eval-BN already folded into this Linear):
        y = x @ W'_k + b'_k ;  y = LeakyReLU(y)     (Dropout = identity in eval)
    Final layer:
        out = x @ W'_f + b'_f
    Weights/activations are bf16 into the MXU with f32 accumulation.
    refs = (w_0, w_1, ..., w_final, out_ref); biases live packed in bias_ref.
    """
    out_ref = refs[-1]
    w_refs = refs[:-1]

    x = h_ref[...].astype(jnp.bfloat16)          # in-kernel cast (no wrapper pass)
    for k in range(n_blocks):
        b = bias_ref[k:k + 1, :d_fc_p]           # (1, d_fc_p) f32, static slice
        y = jnp.dot(x, w_refs[k][...], preferred_element_type=jnp.float32) + b
        y = y.astype(jnp.bfloat16)               # bf16 elementwise (cheap on v6e/v7x)
        x = jnp.where(y >= 0, y, LEAKY_SLOPE * y)
    b = bias_ref[n_blocks:n_blocks + 1, :n_tasks_p]
    out = jnp.dot(x, w_refs[n_blocks][...], preferred_element_type=jnp.float32) + b
    out_ref[...] = out.astype(out_ref.dtype)     # bf16 lane-dense writeback


def make_fc_params(key, d_graph_layer, d_FC_layer, n_FC_layer, n_tasks):
    """Deterministic synthetic parameters matching the module's shapes.

    Flat list: per block [W (in,out), b (1,out), gamma, beta, run_mean, run_var]
    (all (1,out) except W), then final [W (d_FC, n_tasks), b (1, n_tasks)].
    """
    assert n_FC_layer >= 1
    params = []
    in_dim = d_graph_layer
    for _ in range(n_FC_layer):
        key, k1, k2, k3, k4, k5, k6 = jax.random.split(key, 7)
        out_dim = d_FC_layer
        w = jax.random.normal(k1, (in_dim, out_dim), jnp.float32) * (1.0 / jnp.sqrt(in_dim))
        b = jax.random.normal(k2, (1, out_dim), jnp.float32) * 0.1
        gamma = 1.0 + 0.1 * jax.random.normal(k3, (1, out_dim), jnp.float32)
        beta = 0.1 * jax.random.normal(k4, (1, out_dim), jnp.float32)
        rmean = 0.1 * jax.random.normal(k5, (1, out_dim), jnp.float32)
        rvar = 1.0 + 0.1 * jnp.abs(jax.random.normal(k6, (1, out_dim), jnp.float32))
        params += [w, b, gamma, beta, rmean, rvar]
        in_dim = out_dim
    key, k1, k2 = jax.random.split(key, 3)
    wf = jax.random.normal(k1, (d_FC_layer, n_tasks), jnp.float32) * (1.0 / jnp.sqrt(d_FC_layer))
    bf = jax.random.normal(k2, (1, n_tasks), jnp.float32) * 0.1
    params += [wf, bf]
    return params


def fold_fc_params(params, n_FC_layer, d_graph_layer, d_FC_layer, n_tasks):
    """Fold eval-mode BN_k (affine on running stats) into the NEXT Linear.

    Module block k:  a_k = LeakyReLU(x_k @ W_k + b_k);  x_{k+1} = s_k * a_k + t_k
        with s_k = gamma_k / sqrt(rv_k + eps),  t_k = beta_k - rm_k * s_k.
    Folded block k:  a_k = LeakyReLU(a_{k-1} @ W'_k + b'_k)
        with W'_k = diag(s_{k-1}) @ W_k,  b'_k = b_k + t_{k-1} @ W_k.
    The last block's BN is folded into the final Linear the same way.
    This rewrite is exact (BN is affine and is folded AFTER the nonlinearity).

    Returns: (list of bf16 lane-padded weights, packed f32 bias matrix, pads).
    """
    dg_p = _round_up(d_graph_layer, LANE)
    df_p = _round_up(d_FC_layer, LANE)
    nt_p = _round_up(n_tasks, LANE)
    bias_w = max(df_p, nt_p)

    w_list, biases = [], []
    idx = 0
    in_dim, in_pad = d_graph_layer, dg_p
    pend_s = None   # (1, in_dim) pending BN scale from the previous block
    pend_t = None   # (1, in_dim) pending BN shift from the previous block
    for _ in range(n_FC_layer):
        w, b, g, beta, rm, rv = params[idx:idx + 6]
        idx += 6
        if pend_s is not None:
            w_eff = w * pend_s.T                 # row-scale by previous BN scale
            b_eff = b + pend_t @ w               # absorb previous BN shift
        else:
            w_eff, b_eff = w, b
        pend_s = g * jax.lax.rsqrt(rv + BN_EPS)  # this block's BN -> next Linear
        pend_t = beta - rm * pend_s
        w_p = jnp.zeros((in_pad, df_p), jnp.float32).at[:in_dim, :d_FC_layer].set(w_eff)
        b_p = jnp.zeros((bias_w,), jnp.float32).at[:d_FC_layer].set(b_eff[0])
        w_list.append(w_p.astype(jnp.bfloat16))
        biases.append(b_p)
        in_dim, in_pad = d_FC_layer, df_p

    wf, bf = params[idx], params[idx + 1]
    wf_eff = wf * pend_s.T
    bf_eff = bf + pend_t @ wf
    wf_p = jnp.zeros((df_p, nt_p), jnp.float32).at[:d_FC_layer, :n_tasks].set(wf_eff)
    bf_p = jnp.zeros((bias_w,), jnp.float32).at[:n_tasks].set(bf_eff[0])
    w_list.append(wf_p.astype(jnp.bfloat16))
    biases.append(bf_p)

    bias_mat = jnp.stack(biases, axis=0)         # (n_FC_layer + 1, bias_w) f32
    return w_list, bias_mat, (dg_p, df_p, nt_p)


def fc_forward(h, params, n_FC_layer, n_tasks, batch_tile=512):
    N, d_graph = h.shape
    d_FC = params[0].shape[1]

    w_list, bias_mat, (dg_p, df_p, nt_p) = fold_fc_params(
        params, n_FC_layer, d_graph, d_FC, n_tasks)

    # Row tile: bf16-sublane aligned (multiple of 16).  Small batches run as a
    # single step (per-step overhead dominates; the grid is a sequential loop on
    # v5e/v6e anyway); larger N naturally splits into multiple parallel steps.
    bt = min(batch_tile, _round_up(N, SUBLANE_BF16))
    n_pad = _round_up(N, bt)

    # Only pad when needed; the bf16 cast happens inside the kernel so an
    # already-aligned f32 h avoids any extra wrapper-side HBM pass.
    if n_pad == N and dg_p == d_graph:
        h_p = h
    else:
        h_p = jnp.pad(h, ((0, n_pad - N), (0, dg_p - d_graph)))

    kernel = functools.partial(_fc_kernel, n_FC_layer, df_p, nt_p)

    in_specs = [pl.BlockSpec((bt, dg_p), lambda i: (i, 0)),
                pl.BlockSpec(bias_mat.shape, lambda i: (0, 0))]
    for w in w_list:
        # Grid-invariant params: constant index_map -> fetched once, resident.
        in_specs.append(pl.BlockSpec(w.shape, lambda i: (0, 0)))
    out_spec = pl.BlockSpec((bt, nt_p), lambda i: (i, 0))     # lane-dense vst

    out_padded = pl.pallas_call(
        kernel,
        out_shape=jax.ShapeDtypeStruct((n_pad, nt_p), jnp.bfloat16),
        grid_spec=pltpu.PrefetchScalarGridSpec(
            num_scalar_prefetch=0,
            grid=(n_pad // bt,),
            in_specs=in_specs,
            out_specs=out_spec,
        ),
        compiler_params=pltpu.CompilerParams(
            dimension_semantics=("parallel",),
            vmem_limit_bytes=32 * 1024 * 1024,   # ample for bt<=512 at these widths
        ),
    )(h_p, bias_mat, *w_list)

    # Tiny slice + cast back to the module's f32 output dtype.
    return out_padded[:N, :n_tasks].astype(jnp.float32)


def fc_forward_ref(h, params, n_FC_layer):
    """Pure-JAX f32 eval-mode reference with the module's exact operator order:
    Linear -> Dropout(identity) -> LeakyReLU -> BatchNorm(running stats)."""
    x = h.astype(jnp.float32)
    idx = 0
    for _ in range(n_FC_layer):
        w, b, g, beta, rm, rv = params[idx:idx + 6]
        idx += 6
        y = x @ w + b
        y = jnp.where(y >= 0.0, y, LEAKY_SLOPE * y)
        y = (y - rm) * jax.lax.rsqrt(rv + BN_EPS) * g + beta
        x = y
    wf, bf = params[idx], params[idx + 1]
    return x @ wf + bf


def fc_forward_ref_folded(h, w_list, bias_mat, n_blocks, dims, n_tasks):
    """Pure-JAX reference on the exact folded/bf16 params the kernel consumes
    (same math path; differs only in MXU accumulation order)."""
    dg_p, df_p, nt_p = dims
    d_graph = h.shape[1]
    x = jnp.pad(h, ((0, 0), (0, dg_p - d_graph))).astype(jnp.bfloat16)
    for k in range(n_blocks):
        y = jnp.dot(x, w_list[k], preferred_element_type=jnp.float32) + bias_mat[k, :df_p]
        y = y.astype(jnp.bfloat16)
        x = jnp.where(y >= 0, y, LEAKY_SLOPE * y)
    out = jnp.dot(x, w_list[n_blocks], preferred_element_type=jnp.float32) + bias_mat[n_blocks, :nt_p]
    out = out.astype(jnp.bfloat16).astype(jnp.float32)   # mirror kernel's bf16 writeback
    return out[:, :n_tasks]


if __name__ == "__main__":
    # Small, module-consistent shapes.
    d_graph_layer = 32
    d_FC_layer = 64
    n_FC_layer = 3
    dropout = 0.1          # unused at inference (Dropout = identity)
    n_tasks = 4
    N = 16                 # batch of graph-level embeddings

    key = jax.random.PRNGKey(0)
    key, kh, kp = jax.random.split(key, 3)
    h = jax.random.normal(kh, (N, d_graph_layer), jnp.float32)
    params = make_fc_params(kp, d_graph_layer, d_FC_layer, n_FC_layer, n_tasks)

    out = fc_forward(h, params, n_FC_layer, n_tasks)
    out = jax.block_until_ready(out)
    assert out.shape == (N, n_tasks)

    # Tight check: identical folded bf16 params / math path as the kernel.
    w_list, bias_mat, dims = fold_fc_params(params, n_FC_layer, d_graph_layer,
                                            d_FC_layer, n_tasks)
    ref_folded = fc_forward_ref_folded(h, w_list, bias_mat, n_FC_layer, dims, n_tasks)
    assert jnp.allclose(out, ref_folded, rtol=2e-2, atol=2e-2), \
        "Pallas output mismatch vs folded-param JAX reference"

    # Loose check vs full-precision, unfolded module semantics
    # (difference is only bf16 weight/activation/output quantization).
    ref_f32 = fc_forward_ref(h, params, n_FC_layer)
    assert jnp.allclose(out, ref_f32, rtol=5e-2, atol=5e-2), \
        "Pallas output deviates too far from f32 reference"

    print("KERNEL_OK")
</pallas_src>

<mosaic_0001>
module attributes {stable_mosaic.version = 11 : i64} {
  func.func @_fc_kernel(%arg0: i32, %arg1: memref<16x128xf32, #tpu.memory_space<vmem>>, %arg2: memref<4x128xf32, #tpu.memory_space<vmem>>, %arg3: memref<128x128xbf16, #tpu.memory_space<vmem>>, %arg4: memref<128x128xbf16, #tpu.memory_space<vmem>>, %arg5: memref<128x128xbf16, #tpu.memory_space<vmem>>, %arg6: memref<128x128xbf16, #tpu.memory_space<vmem>>, %arg7: memref<16x128xbf16, #tpu.memory_space<vmem>>) attributes {dimension_semantics = [#tpu.dimension_semantics<parallel>], iteration_bounds = array<i64: 1>, scalar_prefetch = 0 : i64, scratch_operands = 0 : i64, tpu.core_type = #tpu.core_type<tc>, window_params = [{transform_indices = @transform_0, window_bounds = array<i64: 16, 128>}, {pipeline_mode = #tpu.pipeline_mode<synchronous>, transform_indices = @transform_1, window_bounds = array<i64: 4, 128>}, {pipeline_mode = #tpu.pipeline_mode<synchronous>, transform_indices = @transform_2, window_bounds = array<i64: 128, 128>}, {pipeline_mode = #tpu.pipeline_mode<synchronous>, transform_indices = @transform_3, window_bounds = array<i64: 128, 128>}, {pipeline_mode = #tpu.pipeline_mode<synchronous>, transform_indices = @transform_4, window_bounds = array<i64: 128, 128>}, {pipeline_mode = #tpu.pipeline_mode<synchronous>, transform_indices = @transform_5, window_bounds = array<i64: 128, 128>}, {transform_indices = @transform_6, window_bounds = array<i64: 16, 128>}]} {
    %c0 = arith.constant 0 : index
    %c0_0 = arith.constant 0 : index
    %0 = vector.load %arg1[%c0, %c0_0] : memref<16x128xf32, #tpu.memory_space<vmem>>, vector<16x128xf32>
    %1 = arith.truncf %0 : vector<16x128xf32> to vector<16x128xbf16>
    %c0_1 = arith.constant 0 : index
    %c0_2 = arith.constant 0 : index
    %2 = vector.load %arg2[%c0_1, %c0_2] : memref<4x128xf32, #tpu.memory_space<vmem>>, vector<1x128xf32>
    %c0_3 = arith.constant 0 : index
    %c0_4 = arith.constant 0 : index
    %3 = vector.load %arg3[%c0_3, %c0_4] : memref<128x128xbf16, #tpu.memory_space<vmem>>, vector<128x128xbf16>
    %cst = arith.constant dense<0.000000e+00> : vector<16x128xf32>
    %4 = tpu.matmul %1, %3, %cst {dimension_numbers = #tpu.dot_dimension_numbers<[1], [0], [0], [1], [0, 0, 1, 1], [], []>} : vector<16x128xbf16>, vector<128x128xbf16>, vector<16x128xf32> -> vector<16x128xf32>
    %5 = vector.broadcast %2 : vector<1x128xf32> to vector<16x128xf32>
    %6 = arith.addf %4, %5 : vector<16x128xf32>
    %7 = arith.truncf %6 : vector<16x128xf32> to vector<16x128xbf16>
    %cst_5 = arith.constant 0.000000e+00 : bf16
    %8 = vector.broadcast %cst_5 : bf16 to vector<16x128xbf16>
    %9 = arith.cmpf oge, %7, %8 : vector<16x128xbf16>
    %cst_6 = arith.constant 1.000980e-02 : bf16
    %10 = vector.broadcast %cst_6 : bf16 to vector<16x128xbf16>
    %11 = arith.mulf %10, %7 : vector<16x128xbf16>
    %12 = arith.select %9, %7, %11 : vector<16x128xi1>, vector<16x128xbf16>
    %c1 = arith.constant 1 : index
    %c0_7 = arith.constant 0 : index
    %13 = vector.load %arg2[%c1, %c0_7] : memref<4x128xf32, #tpu.memory_space<vmem>>, vector<1x128xf32>
    %c0_8 = arith.constant 0 : index
    %c0_9 = arith.constant 0 : index
    %14 = vector.load %arg4[%c0_8, %c0_9] : memref<128x128xbf16, #tpu.memory_space<vmem>>, vector<128x128xbf16>
    %cst_10 = arith.constant dense<0.000000e+00> : vector<16x128xf32>
    %15 = tpu.matmul %12, %14, %cst_10 {dimension_numbers = #tpu.dot_dimension_numbers<[1], [0], [0], [1], [0, 0, 1, 1], [], []>} : vector<16x128xbf16>, vector<128x128xbf16>, vector<16x128xf32> -> vector<16x128xf32>
    %16 = vector.broadcast %13 : vector<1x128xf32> to vector<16x128xf32>
    %17 = arith.addf %15, %16 : vector<16x128xf32>
    %18 = arith.truncf %17 : vector<16x128xf32> to vector<16x128xbf16>
    %cst_11 = arith.constant 0.000000e+00 : bf16
    %19 = vector.broadcast %cst_11 : bf16 to vector<16x128xbf16>
    %20 = arith.cmpf oge, %18, %19 : vector<16x128xbf16>
    %cst_12 = arith.constant 1.000980e-02 : bf16
    %21 = vector.broadcast %cst_12 : bf16 to vector<16x128xbf16>
    %22 = arith.mulf %21, %18 : vector<16x128xbf16>
    %23 = arith.select %20, %18, %22 : vector<16x128xi1>, vector<16x128xbf16>
    %c2 = arith.constant 2 : index
    %c0_13 = arith.constant 0 : index
    %24 = vector.load %arg2[%c2, %c0_13] : memref<4x128xf32, #tpu.memory_space<vmem>>, vector<1x128xf32>
    %c0_14 = arith.constant 0 : index
    %c0_15 = arith.constant 0 : index
    %25 = vector.load %arg5[%c0_14, %c0_15] : memref<128x128xbf16, #tpu.memory_space<vmem>>, vector<128x128xbf16>
    %cst_16 = arith.constant dense<0.000000e+00> : vector<16x128xf32>
    %26 = tpu.matmul %23, %25, %cst_16 {dimension_numbers = #tpu.dot_dimension_numbers<[1], [0], [0], [1], [0, 0, 1, 1], [], []>} : vector<16x128xbf16>, vector<128x128xbf16>, vector<16x128xf32> -> vector<16x128xf32>
    %27 = vector.broadcast %24 : vector<1x128xf32> to vector<16x128xf32>
    %28 = arith.addf %26, %27 : vector<16x128xf32>
    %29 = arith.truncf %28 : vector<16x128xf32> to vector<16x128xbf16>
    %cst_17 = arith.constant 0.000000e+00 : bf16
    %30 = vector.broadcast %cst_17 : bf16 to vector<16x128xbf16>
    %31 = arith.cmpf oge, %29, %30 : vector<16x128xbf16>
    %cst_18 = arith.constant 1.000980e-02 : bf16
    %32 = vector.broadcast %cst_18 : bf16 to vector<16x128xbf16>
    %33 = arith.mulf %32, %29 : vector<16x128xbf16>
    %34 = arith.select %31, %29, %33 : vector<16x128xi1>, vector<16x128xbf16>
    %c3 = arith.constant 3 : index
    %c0_19 = arith.constant 0 : index
    %35 = vector.load %arg2[%c3, %c0_19] : memref<4x128xf32, #tpu.memory_space<vmem>>, vector<1x128xf32>
    %c0_20 = arith.constant 0 : index
    %c0_21 = arith.constant 0 : index
    %36 = vector.load %arg6[%c0_20, %c0_21] : memref<128x128xbf16, #tpu.memory_space<vmem>>, vector<128x128xbf16>
    %cst_22 = arith.constant dense<0.000000e+00> : vector<16x128xf32>
    %37 = tpu.matmul %34, %36, %cst_22 {dimension_numbers = #tpu.dot_dimension_numbers<[1], [0], [0], [1], [0, 0, 1, 1], [], []>} : vector<16x128xbf16>, vector<128x128xbf16>, vector<16x128xf32> -> vector<16x128xf32>
    %38 = vector.broadcast %35 : vector<1x128xf32> to vector<16x128xf32>
    %39 = arith.addf %37, %38 : vector<16x128xf32>
    %40 = arith.truncf %39 : vector<16x128xf32> to vector<16x128xbf16>
    %c0_23 = arith.constant 0 : index
    %c0_24 = arith.constant 0 : index
    %41 = vector.load %arg7[%c0_23, %c0_24] : memref<16x128xbf16, #tpu.memory_space<vmem>>, vector<16x128xbf16>
    tpu.vector_store %arg7[%c0_23, %c0_24], %40 {strides = array<i32>} : memref<16x128xbf16, #tpu.memory_space<vmem>>, vector<16x128xbf16>,
    return
  }
  func.func @transform_0(%arg0: i32) -> (i32, i32) {
    %c0_i32 = arith.constant 0 : i32
    %c0_i32_0 = arith.constant 0 : i32
    return %arg0, %c0_i32 : i32, i32
  }
  func.func @transform_1(%arg0: i32) -> (i32, i32) {
    %c0_i32 = arith.constant 0 : i32
    %c0_i32_0 = arith.constant 0 : i32
    %c0_i32_1 = arith.constant 0 : i32
    return %c0_i32, %c0_i32_0 : i32, i32
  }
  func.func @transform_2(%arg0: i32) -> (i32, i32) {
    %c0_i32 = arith.constant 0 : i32
    %c0_i32_0 = arith.constant 0 : i32
    %c0_i32_1 = arith.constant 0 : i32
    return %c0_i32, %c0_i32_0 : i32, i32
  }
  func.func @transform_3(%arg0: i32) -> (i32, i32) {
    %c0_i32 = arith.constant 0 : i32
    %c0_i32_0 = arith.constant 0 : i32
    %c0_i32_1 = arith.constant 0 : i32
    return %c0_i32, %c0_i32_0 : i32, i32
  }
  func.func @transform_4(%arg0: i32) -> (i32, i32) {
    %c0_i32 = arith.constant 0 : i32
    %c0_i32_0 = arith.constant 0 : i32
    %c0_i32_1 = arith.constant 0 : i32
    return %c0_i32, %c0_i32_0 : i32, i32
  }
  func.func @transform_5(%arg0: i32) -> (i32, i32) {
    %c0_i32 = arith.constant 0 : i32
    %c0_i32_0 = arith.constant 0 : i32
    %c0_i32_1 = arith.constant 0 : i32
    return %c0_i32, %c0_i32_0 : i32, i32
  }
  func.func @transform_6(%arg0: i32) -> (i32, i32) {
    %c0_i32 = arith.constant 0 : i32
    %c0_i32_0 = arith.constant 0 : i32
    return %arg0, %c0_i32 : i32, i32
  }
}

</mosaic_0001>

<llo_original>
// kernel: tpu_custom_call.1
$region0: #{tpu_custom_call.1}
  #allocation0 [shape = 'u32[]', space=smem, size = 0x4, offset = 0x4, fixed_abs, tag = 'smem constant byte address 0x4 - core index']
  #allocation1 [shape = 'u32[144,128]{1,0:T(1,128)}', space=vmem, size = 0x12000, scoped, tag = 'internal scratch']
  %s0 = inlined_call_operand.hbm [shape: f32[16,128], index: 0, kind: input, shape index: {}]
  %s1 = inlined_call_operand.hbm [shape: f32[4,128], index: 1, kind: input, shape index: {}]
  %s2 = inlined_call_operand.hbm [shape: bf16[128,128], index: 2, kind: input, shape index: {}]
  %s3 = inlined_call_operand.hbm [shape: bf16[128,128], index: 3, kind: input, shape index: {}]
  %s4 = inlined_call_operand.hbm [shape: bf16[128,128], index: 4, kind: input, shape index: {}]
  %s5 = inlined_call_operand.hbm [shape: bf16[128,128], index: 5, kind: input, shape index: {}]
  %s6 = inlined_call_operand.hbm [shape: bf16[16,128], index: 6, kind: output, shape index: {}]
  %s7 = sld [smem:[#allocation0]]
  $region58: #{tpu_custom_call.1} parent=0
    _
  %s9 = ssub.s32 1, %s7
  %s10 = scalar_select 0, %s9, %s7
  $region1: #{tpu_custom_call.1} parent=0
    #allocation2 [shape = 'u8[8192]{0}', space=vmem, size = 0x2000, scoped, tag = 'input window, operand 0, single buffered']
    #allocation3 [shape = 's32[1]{0}', space=sflag, size = 0x4, scoped, tag = 'scoped memory for tpu_custom_call.1']
    #allocation4 [shape = 's32[1]{0}', space=sflag, size = 0x4, scoped, tag = 'scoped memory for tpu_custom_call.1']
    #allocation5 [shape = 'u8[2048]{0}', space=vmem, size = 0x800, scoped, tag = 'input window, operand 1, single buffered']
    #allocation6 [shape = 's32[1]{0}', space=sflag, size = 0x4, scoped, tag = 'scoped memory for tpu_custom_call.1']
    #allocation7 [shape = 'u8[32768]{0}', space=vmem, size = 0x8000, scoped, tag = 'input window, operand 2, single buffered']
    #allocation8 [shape = 'u8[32768]{0}', space=vmem, size = 0x8000, scoped, tag = 'input window, operand 3, single buffered']
    #allocation9 [shape = 's32[1]{0}', space=sflag, size = 0x4, scoped, tag = 'scoped memory for tpu_custom_call.1']
    #allocation10 [shape = 'u8[32768]{0}', space=vmem, size = 0x8000, scoped, tag = 'input window, operand 4, single buffered']
    #allocation11 [shape = 'u8[32768]{0}', space=vmem, size = 0x8000, scoped, tag = 'input window, operand 5, single buffered']
    #allocation12 [shape = 's32[1]{0}', space=sflag, size = 0x4, scoped, tag = 'scoped memory for tpu_custom_call.1']
    #allocation13 [shape = 'u8[4096]{0}', space=vmem, size = 0x1000, scoped, tag = 'output window, operand 0, single buffered']
    %11 = vsyncpa [#allocation3], 0
    %12 = vsyncpa [#allocation6], 0
    %13 = vsyncpa [#allocation9], 0
    %14 = vsyncpa [#allocation12], 0
    %15 = vsyncpa [#allocation4], 0
    // Predicated region
    $region2: #{tpu_custom_call.1} parent=1 // pred_check
      _
    $region3: #{tpu_custom_call.1} parent=1 // pred_check_branch
      %17 = sbr.rel (0) target = $region5
    $region4: #{tpu_custom_call.1} parent=1 // pred_region
      %s19 = ssub.s32 256, 256
      %20 = vsyncadd [#allocation3], %s19
      %s21 = sshll.u32 [#allocation2], 4
      %s22 = int_to_ptr.vmem [resolvable:$true] %s21
      %27 = dma.hbm_to_vmem [thread:$0]  %s0, 256, %s22, [#allocation3], 128, 128, 8
    $region5: #{tpu_custom_call.1} parent=1 // pred_fallthru
      _
    // Predicated region
    $region6: #{tpu_custom_call.1} parent=1 // pred_check
      _
    $region7: #{tpu_custom_call.1} parent=1 // pred_check_branch
      %29 = sbr.rel (0) target = $region9
    $region8: #{tpu_custom_call.1} parent=1 // pred_region
      %s31 = ssub.s32 64, 64
      %32 = vsyncadd [#allocation6], %s31
      %s34 = sshll.u32 [#allocation5], 4
      %s35 = int_to_ptr.vmem [resolvable:$true] %s34
      %37 = dma.hbm_to_vmem [thread:$0]  %s1, 64, %s35, [#allocation6]
    $region9: #{tpu_custom_call.1} parent=1 // pred_fallthru
      _
    // Predicated region
    $region10: #{tpu_custom_call.1} parent=1 // pred_check
      _
    $region11: #{tpu_custom_call.1} parent=1 // pred_check_branch
      %39 = sbr.rel (0) target = $region13
    $region12: #{tpu_custom_call.1} parent=1 // pred_region
      %s41 = ssub.s32 1024, 1024
      %42 = vsyncadd [#allocation6], %s41
      %s43 = sshll.u32 [#allocation7], 4
      %s44 = int_to_ptr.vmem [resolvable:$true] %s43
      %49 = dma.hbm_to_vmem [thread:$0]  %s2, 1024, %s44, [#allocation6], 64, 64, 4
    $region13: #{tpu_custom_call.1} parent=1 // pred_fallthru
      _
    // Predicated region
    $region14: #{tpu_custom_call.1} parent=1 // pred_check
      _
    $region15: #{tpu_custom_call.1} parent=1 // pred_check_branch
      %51 = sbr.rel (0) target = $region17
    $region16: #{tpu_custom_call.1} parent=1 // pred_region
      %s53 = ssub.s32 1024, 1024
      %54 = vsyncadd [#allocation9], %s53
      %s55 = sshll.u32 [#allocation8], 4
      %s56 = int_to_ptr.vmem [resolvable:$true] %s55
      %61 = dma.hbm_to_vmem [thread:$0]  %s3, 1024, %s56, [#allocation9], 64, 64, 4
    $region17: #{tpu_custom_call.1} parent=1 // pred_fallthru
      _
    // Predicated region
    $region18: #{tpu_custom_call.1} parent=1 // pred_check
      _
    $region19: #{tpu_custom_call.1} parent=1 // pred_check_branch
      %63 = sbr.rel (0) target = $region21
    $region20: #{tpu_custom_call.1} parent=1 // pred_region
      %s65 = ssub.s32 1024, 1024
      %66 = vsyncadd [#allocation9], %s65
      %s67 = sshll.u32 [#allocation10], 4
      %s68 = int_to_ptr.vmem [resolvable:$true] %s67
      %73 = dma.hbm_to_vmem [thread:$0]  %s4, 1024, %s68, [#allocation9], 64, 64, 4
    $region21: #{tpu_custom_call.1} parent=1 // pred_fallthru
      _
    // Predicated region
    $region22: #{tpu_custom_call.1} parent=1 // pred_check
      _
    $region23: #{tpu_custom_call.1} parent=1 // pred_check_branch
      %75 = sbr.rel (0) target = $region25
    $region24: #{tpu_custom_call.1} parent=1 // pred_region
      %s77 = ssub.s32 1024, 1024
      %78 = vsyncadd [#allocation12], %s77
      %s79 = sshll.u32 [#allocation11], 4
      %s80 = int_to_ptr.vmem [resolvable:$true] %s79
      %85 = dma.hbm_to_vmem [thread:$0]  %s5, 1024, %s80, [#allocation12], 64, 64, 4
    $region25: #{tpu_custom_call.1} parent=1 // pred_fallthru
      _
    // Predicated region
    $region26: #{tpu_custom_call.1} parent=1 // pred_check
      _
    $region27: #{tpu_custom_call.1} parent=1 // pred_check_branch
      %87 = sbr.rel (0) target = $region29
    $region28: #{tpu_custom_call.1} parent=1 // pred_region
      %88 = dma.done [#allocation3], 256
    $region29: #{tpu_custom_call.1} parent=1 // pred_fallthru
      _
    // Predicated region
    $region30: #{tpu_custom_call.1} parent=1 // pred_check
      _
    $region31: #{tpu_custom_call.1} parent=1 // pred_check_branch
      %90 = sbr.rel (0) target = $region33
    $region32: #{tpu_custom_call.1} parent=1 // pred_region
      %91 = dma.done [#allocation6], 64
    $region33: #{tpu_custom_call.1} parent=1 // pred_fallthru
      _
    // Predicated region
    $region34: #{tpu_custom_call.1} parent=1 // pred_check
      _
    $region35: #{tpu_custom_call.1} parent=1 // pred_check_branch
      %93 = sbr.rel (0) target = $region37
    $region36: #{tpu_custom_call.1} parent=1 // pred_region
      %94 = dma.done [#allocation6], 1024
    $region37: #{tpu_custom_call.1} parent=1 // pred_fallthru
      _
    // Predicated region
    $region38: #{tpu_custom_call.1} parent=1 // pred_check
      _
    $region39: #{tpu_custom_call.1} parent=1 // pred_check_branch
      %96 = sbr.rel (0) target = $region41
    $region40: #{tpu_custom_call.1} parent=1 // pred_region
      %97 = dma.done [#allocation9], 1024
    $region41: #{tpu_custom_call.1} parent=1 // pred_fallthru
      _
    // Predicated region
    $region42: #{tpu_custom_call.1} parent=1 // pred_check
      _
    $region43: #{tpu_custom_call.1} parent=1 // pred_check_branch
      %99 = sbr.rel (0) target = $region45
    $region44: #{tpu_custom_call.1} parent=1 // pred_region
      %100 = dma.done [#allocation9], 1024
    $region45: #{tpu_custom_call.1} parent=1 // pred_fallthru
      _
    // Predicated region
    $region46: #{tpu_custom_call.1} parent=1 // pred_check
      _
    $region47: #{tpu_custom_call.1} parent=1 // pred_check_branch
      %102 = sbr.rel (0) target = $region49
    $region48: #{tpu_custom_call.1} parent=1 // pred_region
      %103 = dma.done [#allocation12], 1024
    $region49: #{tpu_custom_call.1} parent=1 // pred_fallthru
      _
    %v106 = vld [vmem:[#allocation2] sm:$0xff]
    %v107 = vld [vmem:[#allocation2 + $0x8] sm:$0xff]
    %v108 = vpack.c.bf16 %v107, %v106
    %v109 = vld [vmem:[#allocation5] sm:$0x1]
    %v110 = vld [vmem:[#allocation7] sm:$0xf]
    %v111 = vld [vmem:[#allocation7 + $0x4] sm:$0xf]
    %v112 = vld [vmem:[#allocation7 + $0x8] sm:$0xf]
    %v113 = vld [vmem:[#allocation7 + $0xc] sm:$0xf]
    %v114 = vld [vmem:[#allocation7 + $0x10] sm:$0xf]
    %v115 = vld [vmem:[#allocation7 + $0x14] sm:$0xf]
    %v116 = vld [vmem:[#allocation7 + $0x18] sm:$0xf]
    %v117 = vld [vmem:[#allocation7 + $0x1c] sm:$0xf]
    %v118 = vld [vmem:[#allocation7 + $0x20] sm:$0xf]
    %v119 = vld [vmem:[#allocation7 + $0x24] sm:$0xf]
    %v120 = vld [vmem:[#allocation7 + $0x28] sm:$0xf]
    %v121 = vld [vmem:[#allocation7 + $0x2c] sm:$0xf]
    %v122 = vld [vmem:[#allocation7 + $0x30] sm:$0xf]
    %v123 = vld [vmem:[#allocation7 + $0x34] sm:$0xf]
    %v124 = vld [vmem:[#allocation7 + $0x38] sm:$0xf]
    %v125 = vld [vmem:[#allocation7 + $0x3c] sm:$0xf]
    %v126 = vlaneseq
    %v127 = vshrl.u32 %v126, 7
    %v128 = vsub.s32 0, %v127
    %v129 = vrot.slane %v109, %v128
    %v146 = vunpack.c.l.b16 %v110
    %v147 = vunpack.c.l.b16 %v111
    %v148 = vunpack.c.l.b16 %v112
    %v149 = vunpack.c.l.b16 %v113
    %v150 = vunpack.c.l.b16 %v114
    %v151 = vunpack.c.l.b16 %v115
    %v152 = vunpack.c.l.b16 %v116
    %v153 = vunpack.c.l.b16 %v117
    %v154 = vunpack.c.l.b16 %v118
    %v155 = vunpack.c.l.b16 %v119
    %v156 = vunpack.c.l.b16 %v120
    %v157 = vunpack.c.l.b16 %v121
    %v158 = vunpack.c.l.b16 %v122
    %v159 = vunpack.c.l.b16 %v123
    %v160 = vunpack.c.l.b16 %v124
    %v161 = vunpack.c.l.b16 %v125
    %v162 = vpack.c.b16 %v147, %v146
    %v163 = vpack.c.b16 %v149, %v148
    %v164 = vpack.c.b16 %v151, %v150
    %v165 = vpack.c.b16 %v153, %v152
    %v166 = vpack.c.b16 %v155, %v154
    %v167 = vpack.c.b16 %v157, %v156
    %v168 = vpack.c.b16 %v159, %v158
    %v169 = vpack.c.b16 %v161, %v160
    %178 = vmatprep.subr.bf16.mxu0 0
    %179 = vmatpush1.bf16.msra.mxu0 %v169
    %180 = vmatprep.subr.bf16.mxu0 0
    %181 = vmatpush1.bf16.msra.mxu0 %v168
    %182 = vmatprep.subr.bf16.mxu0 0
    %183 = vmatpush1.bf16.msra.mxu0 %v167
    %184 = vmatprep.subr.bf16.mxu0 0
    %185 = vmatpush1.bf16.msra.mxu0 %v166
    %186 = vmatprep.subr.bf16.mxu0 0
    %187 = vmatpush1.bf16.msra.mxu0 %v165
    %188 = vmatprep.subr.bf16.mxu0 0
    %189 = vmatpush1.bf16.msra.mxu0 %v164
    %190 = vmatprep.subr.bf16.mxu0 0
    %191 = vmatpush1.bf16.msra.mxu0 %v163
    %192 = vmatprep.subr.bf16.mxu0 0
    %193 = vmatpush1.bf16.msra.mxu0 %v162
    %194 = vmatprep.subr.bf16.mxu0 0
    %195 = vmatpush2.bf16.msra.mxu0 0
    %196 = vmatprep.subr.bf16.mxu0 0
    %197 = vmatpush2.bf16.msra.mxu0 0
    %198 = vmatprep.subr.bf16.mxu0 0
    %199 = vmatpush2.bf16.msra.mxu0 0
    %200 = vmatprep.subr.bf16.mxu0 0
    %201 = vmatpush2.bf16.msra.mxu0 0
    %202 = vmatprep.subr.bf16.mxu0 0
    %203 = vmatpush2.bf16.msra.mxu0 0
    %204 = vmatprep.subr.bf16.mxu0 0
    %205 = vmatpush2.bf16.msra.mxu0 0
    %206 = vmatprep.subr.bf16.mxu0 0
    %207 = vmatpush2.bf16.msra.mxu0 0
    %208 = vmatprep.subr.bf16.mxu0 0
    %209 = vmatpush2.bf16.msra.mxu0 0
    %210 = vmatprep.mubr.bf16.mxu0 0
    %211 = vmatmul.mubr.bf16.gmra.mxu0 %v108
    %v212 = vpop.f32.mrf.mxu0
    %v213 = vadd.f32 %v129, %v212
    %v214 = vpop.f32.mrf.mxu0
    %v215 = vpop.f32.mrf.mxu0
    %v216 = vadd.f32 %v129, %v215
    %v217 = vpop.f32.mrf.mxu0
    %218 = vdwg.mxu0
    %v219 = vpack.c.bf16 %v216, %v213
    %vm220 = vcmp.ge.bf16.partialorder %v219, 0
    %v221 = vmul.bf16 %v219, 1009007652
    %v222 = vsel %vm220, %v219, %v221
    %v223 = vld [vmem:[#allocation5 + $0x1] sm:$0x1]
    %v224 = vld [vmem:[#allocation8] sm:$0xf]
    %v225 = vld [vmem:[#allocation8 + $0x4] sm:$0xf]
    %v226 = vld [vmem:[#allocation8 + $0x8] sm:$0xf]
    %v227 = vld [vmem:[#allocation8 + $0xc] sm:$0xf]
    %v228 = vld [vmem:[#allocation8 + $0x10] sm:$0xf]
    %v229 = vld [vmem:[#allocation8 + $0x14] sm:$0xf]
    %v230 = vld [vmem:[#allocation8 + $0x18] sm:$0xf]
    %v231 = vld [vmem:[#allocation8 + $0x1c] sm:$0xf]
    %v232 = vld [vmem:[#allocation8 + $0x20] sm:$0xf]
    %v233 = vld [vmem:[#allocation8 + $0x24] sm:$0xf]
    %v234 = vld [vmem:[#allocation8 + $0x28] sm:$0xf]
    %v235 = vld [vmem:[#allocation8 + $0x2c] sm:$0xf]
    %v236 = vld [vmem:[#allocation8 + $0x30] sm:$0xf]
    %v237 = vld [vmem:[#allocation8 + $0x34] sm:$0xf]
    %v238 = vld [vmem:[#allocation8 + $0x38] sm:$0xf]
    %v239 = vld [vmem:[#allocation8 + $0x3c] sm:$0xf]
    %v240 = vlaneseq
    %v241 = vshrl.u32 %v240, 7
    %v242 = vsub.s32 0, %v241
    %v243 = vrot.slane %v223, %v242
    %v260 = vunpack.c.l.b16 %v224
    %v261 = vunpack.c.l.b16 %v225
    %v262 = vunpack.c.l.b16 %v226
    %v263 = vunpack.c.l.b16 %v227
    %v264 = vunpack.c.l.b16 %v228
    %v265 = vunpack.c.l.b16 %v229
    %v266 = vunpack.c.l.b16 %v230
    %v267 = vunpack.c.l.b16 %v231
    %v268 = vunpack.c.l.b16 %v232
    %v269 = vunpack.c.l.b16 %v233
    %v270 = vunpack.c.l.b16 %v234
    %v271 = vunpack.c.l.b16 %v235
    %v272 = vunpack.c.l.b16 %v236
    %v273 = vunpack.c.l.b16 %v237
    %v274 = vunpack.c.l.b16 %v238
    %v275 = vunpack.c.l.b16 %v239
    %v276 = vpack.c.b16 %v261, %v260
    %v277 = vpack.c.b16 %v263, %v262
    %v278 = vpack.c.b16 %v265, %v264
    %v279 = vpack.c.b16 %v267, %v266
    %v280 = vpack.c.b16 %v269, %v268
    %v281 = vpack.c.b16 %v271, %v270
    %v282 = vpack.c.b16 %v273, %v272
    %v283 = vpack.c.b16 %v275, %v274
    %292 = vmatprep.subr.bf16.mxu0 0
    %293 = vmatpush1.bf16.msra.mxu0 %v283
    %294 = vmatprep.subr.bf16.mxu0 0
    %295 = vmatpush1.bf16.msra.mxu0 %v282
    %296 = vmatprep.subr.bf16.mxu0 0
    %297 = vmatpush1.bf16.msra.mxu0 %v281
    %298 = vmatprep.subr.bf16.mxu0 0
    %299 = vmatpush1.bf16.msra.mxu0 %v280
    %300 = vmatprep.subr.bf16.mxu0 0
    %301 = vmatpush1.bf16.msra.mxu0 %v279
    %302 = vmatprep.subr.bf16.mxu0 0
    %303 = vmatpush1.bf16.msra.mxu0 %v278
    %304 = vmatprep.subr.bf16.mxu0 0
    %305 = vmatpush1.bf16.msra.mxu0 %v277
    %306 = vmatprep.subr.bf16.mxu0 0
    %307 = vmatpush1.bf16.msra.mxu0 %v276
    %308 = vmatprep.subr.bf16.mxu0 0
    %309 = vmatpush2.bf16.msra.mxu0 0
    %310 = vmatprep.subr.bf16.mxu0 0
    %311 = vmatpush2.bf16.msra.mxu0 0
    %312 = vmatprep.subr.bf16.mxu0 0
    %313 = vmatpush2.bf16.msra.mxu0 0
    %314 = vmatprep.subr.bf16.mxu0 0
    %315 = vmatpush2.bf16.msra.mxu0 0
    %316 = vmatprep.subr.bf16.mxu0 0
    %317 = vmatpush2.bf16.msra.mxu0 0
    %318 = vmatprep.subr.bf16.mxu0 0
    %319 = vmatpush2.bf16.msra.mxu0 0
    %320 = vmatprep.subr.bf16.mxu0 0
    %321 = vmatpush2.bf16.msra.mxu0 0
    %322 = vmatprep.subr.bf16.mxu0 0
    %323 = vmatpush2.bf16.msra.mxu0 0
    %324 = vmatprep.mubr.bf16.mxu0 0
    %325 = vmatmul.mubr.bf16.gmra.mxu0 %v222
    %v326 = vpop.f32.mrf.mxu0
    %v327 = vadd.f32 %v243, %v326
    %v328 = vpop.f32.mrf.mxu0
    %v329 = vpop.f32.mrf.mxu0
    %v330 = vadd.f32 %v243, %v329
    %v331 = vpop.f32.mrf.mxu0
    %332 = vdwg.mxu0
    %v333 = vpack.c.bf16 %v330, %v327
    %vm334 = vcmp.ge.bf16.partialorder %v333, 0
    %v335 = vmul.bf16 %v333, 1009007652
    %v336 = vsel %vm334, %v333, %v335
    %v337 = vld [vmem:[#allocation5 + $0x2] sm:$0x1]
    %v338 = vld [vmem:[#allocation10] sm:$0xf]
    %v339 = vld [vmem:[#allocation10 + $0x4] sm:$0xf]
    %v340 = vld [vmem:[#allocation10 + $0x8] sm:$0xf]
    %v341 = vld [vmem:[#allocation10 + $0xc] sm:$0xf]
    %v342 = vld [vmem:[#allocation10 + $0x10] sm:$0xf]
    %v343 = vld [vmem:[#allocation10 + $0x14] sm:$0xf]
    %v344 = vld [vmem:[#allocation10 + $0x18] sm:$0xf]
    %v345 = vld [vmem:[#allocation10 + $0x1c] sm:$0xf]
    %v346 = vld [vmem:[#allocation10 + $0x20] sm:$0xf]
    %v347 = vld [vmem:[#allocation10 + $0x24] sm:$0xf]
    %v348 = vld [vmem:[#allocation10 + $0x28] sm:$0xf]
    %v349 = vld [vmem:[#allocation10 + $0x2c] sm:$0xf]
    %v350 = vld [vmem:[#allocation10 + $0x30] sm:$0xf]
    %v351 = vld [vmem:[#allocation10 + $0x34] sm:$0xf]
    %v352 = vld [vmem:[#allocation10 + $0x38] sm:$0xf]
    %v353 = vld [vmem:[#allocation10 + $0x3c] sm:$0xf]
    %v354 = vlaneseq
    %v355 = vshrl.u32 %v354, 7
    %v356 = vsub.s32 0, %v355
    %v357 = vrot.slane %v337, %v356
    %v374 = vunpack.c.l.b16 %v338
    %v375 = vunpack.c.l.b16 %v339
    %v376 = vunpack.c.l.b16 %v340
    %v377 = vunpack.c.l.b16 %v341
    %v378 = vunpack.c.l.b16 %v342
    %v379 = vunpack.c.l.b16 %v343
    %v380 = vunpack.c.l.b16 %v344
    %v381 = vunpack.c.l.b16 %v345
    %v382 = vunpack.c.l.b16 %v346
    %v383 = vunpack.c.l.b16 %v347
    %v384 = vunpack.c.l.b16 %v348
    %v385 = vunpack.c.l.b16 %v349
    %v386 = vunpack.c.l.b16 %v350
    %v387 = vunpack.c.l.b16 %v351
    %v388 = vunpack.c.l.b16 %v352
    %v389 = vunpack.c.l.b16 %v353
    %v390 = vpack.c.b16 %v375, %v374
    %v391 = vpack.c.b16 %v377, %v376
    %v392 = vpack.c.b16 %v379, %v378
    %v393 = vpack.c.b16 %v381, %v380
    %v394 = vpack.c.b16 %v383, %v382
    %v395 = vpack.c.b16 %v385, %v384
    %v396 = vpack.c.b16 %v387, %v386
    %v397 = vpack.c.b16 %v389, %v388
    %406 = vmatprep.subr.bf16.mxu0 0
    %407 = vmatpush1.bf16.msra.mxu0 %v397
    %408 = vmatprep.subr.bf16.mxu0 0
    %409 = vmatpush1.bf16.msra.mxu0 %v396
    %410 = vmatprep.subr.bf16.mxu0 0
    %411 = vmatpush1.bf16.msra.mxu0 %v395
    %412 = vmatprep.subr.bf16.mxu0 0
    %413 = vmatpush1.bf16.msra.mxu0 %v394
    %414 = vmatprep.subr.bf16.mxu0 0
    %415 = vmatpush1.bf16.msra.mxu0 %v393
    %416 = vmatprep.subr.bf16.mxu0 0
    %417 = vmatpush1.bf16.msra.mxu0 %v392
    %418 = vmatprep.subr.bf16.mxu0 0
    %419 = vmatpush1.bf16.msra.mxu0 %v391
    %420 = vmatprep.subr.bf16.mxu0 0
    %421 = vmatpush1.bf16.msra.mxu0 %v390
    %422 = vmatprep.subr.bf16.mxu0 0
    %423 = vmatpush2.bf16.msra.mxu0 0
    %424 = vmatprep.subr.bf16.mxu0 0
    %425 = vmatpush2.bf16.msra.mxu0 0
    %426 = vmatprep.subr.bf16.mxu0 0
    %427 = vmatpush2.bf16.msra.mxu0 0
    %428 = vmatprep.subr.bf16.mxu0 0
    %429 = vmatpush2.bf16.msra.mxu0 0
    %430 = vmatprep.subr.bf16.mxu0 0
    %431 = vmatpush2.bf16.msra.mxu0 0
    %432 = vmatprep.subr.bf16.mxu0 0
    %433 = vmatpush2.bf16.msra.mxu0 0
    %434 = vmatprep.subr.bf16.mxu0 0
    %435 = vmatpush2.bf16.msra.mxu0 0
    %436 = vmatprep.subr.bf16.mxu0 0
    %437 = vmatpush2.bf16.msra.mxu0 0
    %438 = vmatprep.mubr.bf16.mxu0 0
    %439 = vmatmul.mubr.bf16.gmra.mxu0 %v336
    %v440 = vpop.f32.mrf.mxu0
    %v441 = vadd.f32 %v357, %v440
    %v442 = vpop.f32.mrf.mxu0
    %v443 = vpop.f32.mrf.mxu0
    %v444 = vadd.f32 %v357, %v443
    %v445 = vpop.f32.mrf.mxu0
    %446 = vdwg.mxu0
    %v447 = vpack.c.bf16 %v444, %v441
    %vm448 = vcmp.ge.bf16.partialorder %v447, 0
    %v449 = vmul.bf16 %v447, 1009007652
    %v450 = vsel %vm448, %v447, %v449
    %v451 = vld [vmem:[#allocation5 + $0x3] sm:$0x1]
    %v452 = vld [vmem:[#allocation11] sm:$0xf]
    %v453 = vld [vmem:[#allocation11 + $0x4] sm:$0xf]
    %v454 = vld [vmem:[#allocation11 + $0x8] sm:$0xf]
    %v455 = vld [vmem:[#allocation11 + $0xc] sm:$0xf]
    %v456 = vld [vmem:[#allocation11 + $0x10] sm:$0xf]
    %v457 = vld [vmem:[#allocation11 + $0x14] sm:$0xf]
    %v458 = vld [vmem:[#allocation11 + $0x18] sm:$0xf]
    %v459 = vld [vmem:[#allocation11 + $0x1c] sm:$0xf]
    %v460 = vld [vmem:[#allocation11 + $0x20] sm:$0xf]
    %v461 = vld [vmem:[#allocation11 + $0x24] sm:$0xf]
    %v462 = vld [vmem:[#allocation11 + $0x28] sm:$0xf]
    %v463 = vld [vmem:[#allocation11 + $0x2c] sm:$0xf]
    %v464 = vld [vmem:[#allocation11 + $0x30] sm:$0xf]
    %v465 = vld [vmem:[#allocation11 + $0x34] sm:$0xf]
    %v466 = vld [vmem:[#allocation11 + $0x38] sm:$0xf]
    %v467 = vld [vmem:[#allocation11 + $0x3c] sm:$0xf]
    %v468 = vlaneseq
    %v469 = vshrl.u32 %v468, 7
    %v470 = vsub.s32 0, %v469
    %v471 = vrot.slane %v451, %v470
    %v488 = vunpack.c.l.b16 %v452
    %v489 = vunpack.c.l.b16 %v453
    %v490 = vunpack.c.l.b16 %v454
    %v491 = vunpack.c.l.b16 %v455
    %v492 = vunpack.c.l.b16 %v456
    %v493 = vunpack.c.l.b16 %v457
    %v494 = vunpack.c.l.b16 %v458
    %v495 = vunpack.c.l.b16 %v459
    %v496 = vunpack.c.l.b16 %v460
    %v497 = vunpack.c.l.b16 %v461
    %v498 = vunpack.c.l.b16 %v462
    %v499 = vunpack.c.l.b16 %v463
    %v500 = vunpack.c.l.b16 %v464
    %v501 = vunpack.c.l.b16 %v465
    %v502 = vunpack.c.l.b16 %v466
    %v503 = vunpack.c.l.b16 %v467
    %v504 = vpack.c.b16 %v489, %v488
    %v505 = vpack.c.b16 %v491, %v490
    %v506 = vpack.c.b16 %v493, %v492
    %v507 = vpack.c.b16 %v495, %v494
    %v508 = vpack.c.b16 %v497, %v496
    %v509 = vpack.c.b16 %v499, %v498
    %v510 = vpack.c.b16 %v501, %v500
    %v511 = vpack.c.b16 %v503, %v502
    %520 = vmatprep.subr.bf16.mxu0 0
    %521 = vmatpush1.bf16.msra.mxu0 %v511
    %522 = vmatprep.subr.bf16.mxu0 0
    %523 = vmatpush1.bf16.msra.mxu0 %v510
    %524 = vmatprep.subr.bf16.mxu0 0
    %525 = vmatpush1.bf16.msra.mxu0 %v509
    %526 = vmatprep.subr.bf16.mxu0 0
    %527 = vmatpush1.bf16.msra.mxu0 %v508
    %528 = vmatprep.subr.bf16.mxu0 0
    %529 = vmatpush1.bf16.msra.mxu0 %v507
    %530 = vmatprep.subr.bf16.mxu0 0
    %531 = vmatpush1.bf16.msra.mxu0 %v506
    %532 = vmatprep.subr.bf16.mxu0 0
    %533 = vmatpush1.bf16.msra.mxu0 %v505
    %534 = vmatprep.subr.bf16.mxu0 0
    %535 = vmatpush1.bf16.msra.mxu0 %v504
    %536 = vmatprep.subr.bf16.mxu0 0
    %537 = vmatpush2.bf16.msra.mxu0 0
    %538 = vmatprep.subr.bf16.mxu0 0
    %539 = vmatpush2.bf16.msra.mxu0 0
    %540 = vmatprep.subr.bf16.mxu0 0
    %541 = vmatpush2.bf16.msra.mxu0 0
    %542 = vmatprep.subr.bf16.mxu0 0
    %543 = vmatpush2.bf16.msra.mxu0 0
    %544 = vmatprep.subr.bf16.mxu0 0
    %545 = vmatpush2.bf16.msra.mxu0 0
    %546 = vmatprep.subr.bf16.mxu0 0
    %547 = vmatpush2.bf16.msra.mxu0 0
    %548 = vmatprep.subr.bf16.mxu0 0
    %549 = vmatpush2.bf16.msra.mxu0 0
    %550 = vmatprep.subr.bf16.mxu0 0
    %551 = vmatpush2.bf16.msra.mxu0 0
    %552 = vmatprep.mubr.bf16.mxu0 0
    %553 = vmatmul.mubr.bf16.gmra.mxu0 %v450
    %v554 = vpop.f32.mrf.mxu0
    %v555 = vadd.f32 %v471, %v554
    %v556 = vpop.f32.mrf.mxu0
    %v557 = vpop.f32.mrf.mxu0
    %v558 = vadd.f32 %v471, %v557
    %v559 = vpop.f32.mrf.mxu0
    %560 = vdwg.mxu0
    %v561 = vpack.c.bf16 %v558, %v555
    %v563 = vunpack.c.l.b16 %v561
    %v564 = vunpack.c.h.b16 %v561
    %v565 = vpack.c.b16 %v563, %v563
    %v566 = vpack.c.b16 %v564, %v564
    %569 = vst [vmem:[#allocation13] sm:$0xf] %v565
    %570 = vst [vmem:[#allocation13 + $0x4] sm:$0xf] %v566
    // Predicated region
    $region50: #{tpu_custom_call.1} parent=1 // pred_check
      _
    $region51: #{tpu_custom_call.1} parent=1 // pred_check_branch
      %572 = sbr.rel (0) target = $region53
    $region52: #{tpu_custom_call.1} parent=1 // pred_region
      %s574 = ssub.s32 128, 128
      %575 = vsyncadd [#allocation4], %s574
      %s576 = sshll.u32 [#allocation13], 4
      %s577 = int_to_ptr.vmem [resolvable:$true] %s576
      %582 = dma.vmem_to_hbm [thread:$0]  %s577, 128, %s6, [#allocation4], 64, 64, 4
    $region53: #{tpu_custom_call.1} parent=1 // pred_fallthru
      _
    // Predicated region
    $region54: #{tpu_custom_call.1} parent=1 // pred_check
      _
    $region55: #{tpu_custom_call.1} parent=1 // pred_check_branch
      %584 = sbr.rel (0) target = $region57
    $region56: #{tpu_custom_call.1} parent=1 // pred_region
      %585 = dma.done [#allocation4], 128
    $region57: #{tpu_custom_call.1} parent=1 // pred_fallthru
      _
    %586 = vsyncpa [#allocation3], 1
    %587 = vsyncpa [#allocation6], 1
    %588 = vsyncpa [#allocation9], 1
    %589 = vsyncpa [#allocation12], 1
    %590 = vsyncpa [#allocation4], 1

</llo_original>
